<compile_context>
chip_gen: v6e
topology: v6e:2x2x1
jax: 0.10.0
libtpu: 0.0.40
codegen_flags: <defaults>
</compile_context>

<pallas_src>
import numpy as np
import jax
import jax.numpy as jnp
from jax.experimental import pallas as pl
from jax.experimental.pallas import tpu as pltpu


def _cdiv(a, b):
    return -(-a // b)


def _fused_conv1d(x, w, bias, *, x_left_pad=0, fir_taps=(1.0,), fir_pad=(0, 0),
                  out_len, tile_l=None):
    """Fused (valid conv) -> (zero-pad + FIR correlation) -> (+ bias).

    out[b, co, u] = bias[co] + sum_s fir_taps[s] * ypad[b, co, u + s]
      ypad = zero-pad(y, fir_pad) over the last axis
      y[b, co, m] = sum_{ci,t} w[co, ci, t] * xq[b, ci, m + t],   m in [0, M_y)
      xq = x zero-padded on the left by `x_left_pad` (and zero-extended on the right)
      M_y = out_len + len(fir_taps) - 1 - sum(fir_pad)

    x: (B, Ci, Lx), w: (Co, Ci, Kt), bias: (Co,)  ->  (B, Co, out_len) in x.dtype.
    """
    B, Ci, Lx = x.shape
    Co, Ci2, Kt = w.shape
    assert Ci2 == Ci
    Kf = len(fir_taps)
    plf, prf = fir_pad
    M_y = out_len + Kf - 1 - plf - prf           # true length of the intermediate conv
    assert out_len >= 1 and M_y >= 1
    identity_fir = (Kf == 1 and plf == 0 and prf == 0 and float(fir_taps[0]) == 1.0)

    HALO = 128                                    # look-ahead block covering tap footprint
    assert Kf + Kt - 2 <= HALO, "tap footprint exceeds halo width"
    use_mxu = (Ci * Kt) >= 32                     # contraction deep enough for the MXU

    # ---- output tiling: lane-dense, 128-multiple tiles, VMEM-aware size -------------
    if tile_l is None:
        TL = min(1024, 128 * _cdiv(out_len, 128))
    else:
        TL = max(128, 128 * (tile_l // 128))
    # rough per-lane working set (f32 worst case, double-buffered I/O + in-kernel temps)
    bytes_per_lane = 4 * (3 * Ci + 4 * Co + (Kt * Ci if use_mxu else 0))
    while TL > 128 and TL * bytes_per_lane > 20 * 1024 * 1024:
        TL -= 128
    n_tiles = _cdiv(out_len, TL)
    OutP = n_tiles * TL

    TLY = TL + Kf - 1                             # conv rows needed per output tile
    LinP = OutP + HALO
    total_left = x_left_pad + plf
    assert 0 <= total_left and total_left + Lx <= LinP
    # single wrapper pad: semantic left pad + FIR shift + right zero-fill / alignment
    xp = jnp.pad(x, ((0, 0), (0, 0), (total_left, LinP - total_left - Lx)))

    compute_dtype = x.dtype
    # weights laid out (Co, Kt*Ci), columns ordered t-major / ci-minor
    w2 = jnp.transpose(w, (0, 2, 1)).reshape(Co, Kt * Ci)
    w2 = w2.astype(compute_dtype if use_mxu else jnp.float32)
    b2 = bias.reshape(Co, 1).astype(jnp.float32)
    taps = tuple(float(v) for v in fir_taps)

    def kernel(xm_ref, xh_ref, w_ref, b_ref, o_ref):
        j = pl.program_id(1)
        # (Ci, TL + HALO) window: this tile + 128-lane look-ahead halo
        win = jnp.concatenate([xm_ref[0], xh_ref[0]], axis=-1)
        if use_mxu:
            winc = win.astype(compute_dtype)
            # im2col slab: ONE deep-contraction matmul instead of Kt shallow dots
            slab = jnp.concatenate([winc[:, t:t + TLY] for t in range(Kt)], axis=0)
            y = jnp.dot(w_ref[...], slab, preferred_element_type=jnp.float32)
        else:
            # tiny channels: pure-VPU broadcast FMAs (skip the MXU entirely)
            winc = win.astype(jnp.float32)
            wv = w_ref[...]                                         # (Co, Kt*Ci) f32
            y = jnp.zeros((Co, TLY), jnp.float32)
            for t in range(Kt):
                for ci in range(Ci):
                    idx = t * Ci + ci
                    y = y + wv[:, idx:idx + 1] * winc[ci:ci + 1, t:t + TLY]
        if identity_fir:
            z = y                                                   # TLY == TL
        else:
            # zero conv rows outside the true conv range (implements the FIR zero-pad)
            m_g = (j * TL - plf) + jax.lax.broadcasted_iota(jnp.int32, (1, TLY), 1)
            y = jnp.where((m_g >= 0) & (m_g < M_y), y, 0.0)
            z = jnp.zeros((Co, TL), jnp.float32)
            for s in range(Kf):                                     # constant FIR taps
                z = z + taps[s] * y[:, s:s + TL]
        z = z + b_ref[...]
        o_ref[0] = z.astype(o_ref.dtype)

    hbt = TL // HALO
    out = pl.pallas_call(
        kernel,
        out_shape=jax.ShapeDtypeStruct((B, Co, OutP), x.dtype),
        grid=(B, n_tiles),
        in_specs=[
            pl.BlockSpec((1, Ci, TL), lambda b, j: (b, 0, j)),                 # tile
            pl.BlockSpec((1, Ci, HALO), lambda b, j: (b, 0, (j + 1) * hbt)),   # halo
            pl.BlockSpec((Co, Kt * Ci), lambda b, j: (0, 0)),                  # weights
            pl.BlockSpec((Co, 1), lambda b, j: (0, 0)),                        # bias
        ],
        out_specs=pl.BlockSpec((1, Co, TL), lambda b, j: (b, 0, j)),
        compiler_params=pltpu.CompilerParams(
            dimension_semantics=("parallel", "parallel"),
            vmem_limit_bytes=32 * 1024 * 1024),
    )(xp, xp, w2, b2)
    return out[:, :, :out_len]


class Conv1dPallas:
    """JAX/Pallas port of the PyTorch Conv1d layer (plain / up / down sampling)."""

    def __init__(self, in_ch, out_ch, kernel, up=False, down=False,
                 resample_kernel=(1, 3, 3, 1), use_bias=True, kernel_init=None,
                 *, key, tile_l=None):
        assert not (up and down)
        assert kernel >= 1 and kernel % 2 == 1
        wkey, bkey = jax.random.split(key)
        if kernel_init is not None:
            self.weight = jnp.asarray(kernel_init((out_ch, in_ch, kernel)), jnp.float32)
        else:
            # PyTorch default init is zeros; use small random values so the kernels
            # compute something non-trivial in the self-test.
            self.weight = 0.1 * jax.random.normal(wkey, (out_ch, in_ch, kernel), jnp.float32)
        self.bias = (0.1 * jax.random.normal(bkey, (out_ch,), jnp.float32)
                     if use_bias else None)
        self.up = up
        self.down = down
        self.resample_kernel = resample_kernel
        self.kernel = kernel
        self.use_bias = use_bias
        self.tile_l = tile_l

    # ---- forward paths ---------------------------------------------------------------

    def _forward_plain(self, x):
        K = self.kernel
        Co = self.weight.shape[0]
        b = self.bias if self.use_bias else jnp.zeros((Co,), jnp.float32)
        L = x.shape[-1]
        return _fused_conv1d(x, self.weight, b, x_left_pad=K // 2,
                             fir_taps=(1.0,), fir_pad=(0, 0), out_len=L,
                             tile_l=self.tile_l)

    def _forward_down(self, x, factor=2, gain=1):
        k = np.asarray(self.resample_kernel, np.float32)
        k = k / np.sum(k) * gain
        Kf = len(k)
        p = Kf - factor
        kc = tuple(float(v) for v in k[::-1])                 # correlation order
        B, Cin, L = x.shape
        Co, _, K = self.weight.shape
        My = (L - K) // factor + 1                            # stride-`factor` conv length
        out_len = My + p - Kf + 1

        # polyphase split (glue): xq[b, r*Cin+ci, j] = x[b, ci, j*factor + r]
        Kt = _cdiv(K, factor)
        Lph = _cdiv(L, factor)
        x_pad = jnp.pad(x, ((0, 0), (0, 0), (0, Lph * factor - L)))
        xq = x_pad.reshape(B, Cin, Lph, factor)
        xq = jnp.transpose(xq, (0, 3, 1, 2)).reshape(B, factor * Cin, Lph)

        # phase-split weights: weff[co, r*Cin+ci, tt] = w[co, ci, tt*factor + r]
        phase_w = []
        for r in range(factor):
            cols = []
            for tt in range(Kt):
                t = tt * factor + r
                if t < K:
                    cols.append(self.weight[:, :, t])
                else:
                    cols.append(jnp.zeros((Co, Cin), self.weight.dtype))
            phase_w.append(jnp.stack(cols, axis=-1))
        weff = jnp.concatenate(phase_w, axis=1)               # (Co, factor*Cin, Kt)

        b = self.bias if self.use_bias else jnp.zeros((Co,), jnp.float32)
        return _fused_conv1d(xq, weff, b, x_left_pad=0,
                             fir_taps=kc, fir_pad=(p // 2, (p + 1) // 2),
                             out_len=out_len, tile_l=self.tile_l)

    def _forward_up(self, x, factor=2, gain=1):
        k = np.asarray(self.resample_kernel, np.float32)
        k = k / np.sum(k) * (gain * factor)
        Kf = len(k)
        p = Kf - factor
        pL = p // 2
        kc = k[::-1]
        outC, inC, K = self.weight.shape                      # conv_transpose: in=outC, out=inC
        B, Cx, L = x.shape
        assert Cx == outC
        if self.use_bias:
            assert inC == outC, "bias requires in_ch == out_ch on the up path (as in torch)"

        # Fold conv_transpose(stride=factor) + upfirdn FIR into per-output-phase
        # correlation taps over the ORIGINAL x: C[cy,cx,d] = sum_{d=pL+t-s} kc[s]*w[cx,cy,t]
        dmin = pL - (Kf - 1)
        dmax = pL + K - 1
        ndd = dmax - dmin + 1
        C = jnp.zeros((inC, outC, ndd), self.weight.dtype)
        for s in range(Kf):
            for t in range(K):
                d = pL + t - s
                C = C.at[:, :, d - dmin].add(float(kc[s]) * self.weight[:, :, t].T)

        a_min = min(-((-(dmin - r)) // factor) for r in range(factor))  # ceil((dmin-r)/f)
        a_max = max((dmax - r) // factor for r in range(factor))
        Kt_up = a_max - a_min + 1
        assert a_max >= 0

        rows = []
        for r in range(factor):
            cols = []
            for ap in range(Kt_up):
                d = factor * (a_max - ap) + r
                if dmin <= d <= dmax:
                    cols.append(C[:, :, d - dmin])
                else:
                    cols.append(jnp.zeros((inC, outC), C.dtype))
            rows.append(jnp.stack(cols, axis=-1))             # (inC, outC, Kt_up)
        weff = jnp.concatenate(rows, axis=0)                  # (factor*inC, outC, Kt_up)

        T = (L - 1) * factor + K + p - Kf + 1                 # final output length
        Lq = _cdiv(T, factor)                                 # per-phase length
        bvec = self.bias if self.use_bias else jnp.zeros((inC,), jnp.float32)
        beff = jnp.tile(bvec, factor)                         # channel index = r*inC + cy

        z = _fused_conv1d(x, weff, beff, x_left_pad=a_max,
                          fir_taps=(1.0,), fir_pad=(0, 0), out_len=Lq,
                          tile_l=self.tile_l)                 # (B, factor*inC, Lq)
        z = z.reshape(B, factor, inC, Lq)
        z = jnp.transpose(z, (0, 2, 3, 1)).reshape(B, inC, factor * Lq)
        return z[:, :, :T]

    def __call__(self, x):
        if self.up:
            return self._forward_up(x)
        elif self.down:
            return self._forward_down(x)
        return self._forward_plain(x)


# -------------------------- numpy references (torch semantics) -------------------------

def _ref_plain(x, w, b):
    B, Ci, L = x.shape
    Co, _, K = w.shape
    pad = K // 2
    xp = np.pad(x, ((0, 0), (0, 0), (pad, pad)))
    out = np.zeros((B, Co, L), np.float32)
    for t in range(K):
        out += np.einsum('oc,bcl->bol', w[:, :, t], xp[:, :, t:t + L])
    return out + b.reshape(1, -1, 1)


def _ref_down(x, w, b, rk, factor=2, gain=1):
    B, Ci, L = x.shape
    Co, _, K = w.shape
    k = np.asarray(rk, np.float32); k = k / k.sum() * gain
    Kf = len(k); p = Kf - factor
    My = (L - K) // factor + 1
    y = np.zeros((B, Co, My), np.float32)
    for m in range(My):
        y[:, :, m] = np.einsum('oct,bct->bo', w, x[:, :, m * factor:m * factor + K])
    kc = k[::-1]
    yp = np.pad(y, ((0, 0), (0, 0), (p // 2, (p + 1) // 2)))
    Lo = yp.shape[-1] - Kf + 1
    z = np.zeros((B, Co, Lo), np.float32)
    for s in range(Kf):
        z += kc[s] * yp[:, :, s:s + Lo]
    return z + b.reshape(1, -1, 1)


def _ref_up(x, w, b, rk, factor=2, gain=1):
    B, Cx, L = x.shape
    outC, inC, K = w.shape
    k = np.asarray(rk, np.float32); k = k / k.sum() * (gain * factor)
    Kf = len(k); p = Kf - factor
    Ly = (L - 1) * factor + K
    y = np.zeros((B, inC, Ly), np.float32)
    for m in range(L):
        for t in range(K):
            y[:, :, m * factor + t] += np.einsum('bc,cd->bd', x[:, :, m], w[:, :, t])
    kc = k[::-1]
    yp = np.pad(y, ((0, 0), (0, 0), (p // 2, (p + 1) // 2)))
    Lo = yp.shape[-1] - Kf + 1
    z = np.zeros((B, inC, Lo), np.float32)
    for s in range(Kf):
        z += kc[s] * yp[:, :, s:s + Lo]
    return z + b.reshape(1, -1, 1)


if __name__ == "__main__":
    key = jax.random.PRNGKey(0)
    kx, k1, k2, k3, k4, k5, kx2, kx3 = jax.random.split(key, 8)

    # --- plain path: small channels -> pure-VPU path, single lane-dense tile ---
    B, Cin, Cout, L, K = 2, 4, 8, 16, 3
    x = jax.random.normal(kx, (B, Cin, L), jnp.float32)
    conv = Conv1dPallas(Cin, Cout, K, key=k1)
    y = jax.block_until_ready(conv(x))
    assert y.shape == (B, Cout, L), y.shape
    ref = _ref_plain(np.asarray(x), np.asarray(conv.weight), np.asarray(conv.bias))
    np.testing.assert_allclose(np.asarray(y), ref, rtol=1e-3, atol=1e-3)

    # --- plain path: long length, K=5, tile_l=128 -> multiple tiles (halo correctness) ---
    L2, K2 = 300, 5
    x2 = jax.random.normal(kx2, (2, Cin, L2), jnp.float32)
    conv2 = Conv1dPallas(Cin, Cout, K2, key=k2, tile_l=128)
    y2 = jax.block_until_ready(conv2(x2))
    assert y2.shape == (2, Cout, L2), y2.shape
    ref2 = _ref_plain(np.asarray(x2), np.asarray(conv2.weight), np.asarray(conv2.bias))
    np.testing.assert_allclose(np.asarray(y2), ref2, rtol=1e-3, atol=1e-3)

    # --- plain path: wide channels in bfloat16 -> single deep-contraction MXU matmul ---
    Ci3, Co3, L3 = 32, 32, 256
    x3 = jax.random.normal(kx3, (2, Ci3, L3), jnp.float32).astype(jnp.bfloat16)
    conv3 = Conv1dPallas(Ci3, Co3, 3, key=k3)
    y3 = jax.block_until_ready(conv3(x3))
    assert y3.shape == (2, Co3, L3), y3.shape
    w3 = np.asarray(conv3.weight.astype(jnp.bfloat16).astype(jnp.float32))
    ref3 = _ref_plain(np.asarray(x3.astype(jnp.float32)), w3, np.asarray(conv3.bias))
    np.testing.assert_allclose(np.asarray(y3.astype(jnp.float32)), ref3, rtol=1e-2, atol=1e-2)

    # --- downsample path: polyphase stride fold + fused FIR + bias, one kernel ---
    conv_dn = Conv1dPallas(Cin, Cout, K, down=True, key=k4)
    y_dn = jax.block_until_ready(conv_dn(x))
    assert y_dn.shape == (B, Cout, 6), y_dn.shape
    ref_dn = _ref_down(np.asarray(x), np.asarray(conv_dn.weight), np.asarray(conv_dn.bias),
                       conv_dn.resample_kernel)
    np.testing.assert_allclose(np.asarray(y_dn), ref_dn, rtol=1e-3, atol=1e-3)

    # --- upsample path: conv_transpose + FIR folded into per-phase taps, no zero-stuffing ---
    x_up = jax.random.normal(kx, (B, Cout, L), jnp.float32)
    conv_up = Conv1dPallas(Cout, Cout, K, up=True, key=k5)
    y_up = jax.block_until_ready(conv_up(x_up))
    assert y_up.shape == (B, Cout, 2 * L), y_up.shape
    ref_u = _ref_up(np.asarray(x_up), np.asarray(conv_up.weight), np.asarray(conv_up.bias),
                    conv_up.resample_kernel)
    np.testing.assert_allclose(np.asarray(y_up), ref_u, rtol=1e-3, atol=1e-3)

    print("KERNEL_OK")
</pallas_src>

<mosaic_0001>
module attributes {stable_mosaic.version = 11 : i64} {
  func.func @kernel(%arg0: i32, %arg1: i32, %arg2: memref<1x4x128xf32, #tpu.memory_space<vmem>>, %arg3: memref<1x4x128xf32, #tpu.memory_space<vmem>>, %arg4: memref<8x12xf32, #tpu.memory_space<vmem>>, %arg5: memref<8x1xf32, #tpu.memory_space<vmem>>, %arg6: memref<1x8x128xf32, #tpu.memory_space<vmem>>) attributes {dimension_semantics = [#tpu.dimension_semantics<parallel>, #tpu.dimension_semantics<parallel>], iteration_bounds = array<i64: 2, 1>, scalar_prefetch = 0 : i64, scratch_operands = 0 : i64, tpu.core_type = #tpu.core_type<tc>, window_params = [{transform_indices = @transform_0, window_bounds = array<i64: 1, 4, 128>}, {transform_indices = @transform_1, window_bounds = array<i64: 1, 4, 128>}, {pipeline_mode = #tpu.pipeline_mode<synchronous>, transform_indices = @transform_2, window_bounds = array<i64: 8, 12>}, {pipeline_mode = #tpu.pipeline_mode<synchronous>, transform_indices = @transform_3, window_bounds = array<i64: 8, 1>}, {transform_indices = @transform_4, window_bounds = array<i64: 1, 8, 128>}]} {
    %c0 = arith.constant 0 : index
    %c0_0 = arith.constant 0 : index
    %c0_1 = arith.constant 0 : index
    %0 = vector.load %arg2[%c0, %c0_0, %c0_1] : memref<1x4x128xf32, #tpu.memory_space<vmem>>, vector<1x4x128xf32>
    %1 = vector.shape_cast %0 : vector<1x4x128xf32> to vector<4x128xf32>
    %c0_2 = arith.constant 0 : index
    %c0_3 = arith.constant 0 : index
    %c0_4 = arith.constant 0 : index
    %2 = vector.load %arg3[%c0_2, %c0_3, %c0_4] : memref<1x4x128xf32, #tpu.memory_space<vmem>>, vector<1x4x128xf32>
    %3 = vector.shape_cast %2 : vector<1x4x128xf32> to vector<4x128xf32>
    %4 = tpu.concatenate %1, %3 in 1 : vector<4x128xf32>, vector<4x128xf32> -> vector<4x256xf32>
    %c0_5 = arith.constant 0 : index
    %c0_6 = arith.constant 0 : index
    %5 = vector.load %arg4[%c0_5, %c0_6] : memref<8x12xf32, #tpu.memory_space<vmem>>, vector<8x12xf32>
    %cst = arith.constant 0.000000e+00 : f32
    %6 = vector.broadcast %cst : f32 to vector<8x128xf32>
    %7 = vector.extract_strided_slice %5 {offsets = [0, 0], sizes = [8, 1], strides = [1, 1]} : vector<8x12xf32> to vector<8x1xf32>
    %8 = vector.extract_strided_slice %4 {offsets = [0, 0], sizes = [1, 128], strides = [1, 1]} : vector<4x256xf32> to vector<1x128xf32>
    %9 = vector.broadcast %7 : vector<8x1xf32> to vector<8x128xf32>
    %10 = vector.broadcast %8 : vector<1x128xf32> to vector<8x128xf32>
    %11 = arith.mulf %9, %10 : vector<8x128xf32>
    %12 = arith.addf %6, %11 : vector<8x128xf32>
    %13 = vector.extract_strided_slice %5 {offsets = [0, 1], sizes = [8, 1], strides = [1, 1]} : vector<8x12xf32> to vector<8x1xf32>
    %14 = vector.extract_strided_slice %4 {offsets = [1, 0], sizes = [1, 128], strides = [1, 1]} : vector<4x256xf32> to vector<1x128xf32>
    %15 = vector.broadcast %13 : vector<8x1xf32> to vector<8x128xf32>
    %16 = vector.broadcast %14 : vector<1x128xf32> to vector<8x128xf32>
    %17 = arith.mulf %15, %16 : vector<8x128xf32>
    %18 = arith.addf %12, %17 : vector<8x128xf32>
    %19 = vector.extract_strided_slice %5 {offsets = [0, 2], sizes = [8, 1], strides = [1, 1]} : vector<8x12xf32> to vector<8x1xf32>
    %20 = vector.extract_strided_slice %4 {offsets = [2, 0], sizes = [1, 128], strides = [1, 1]} : vector<4x256xf32> to vector<1x128xf32>
    %21 = vector.broadcast %19 : vector<8x1xf32> to vector<8x128xf32>
    %22 = vector.broadcast %20 : vector<1x128xf32> to vector<8x128xf32>
    %23 = arith.mulf %21, %22 : vector<8x128xf32>
    %24 = arith.addf %18, %23 : vector<8x128xf32>
    %25 = vector.extract_strided_slice %5 {offsets = [0, 3], sizes = [8, 1], strides = [1, 1]} : vector<8x12xf32> to vector<8x1xf32>
    %26 = vector.extract_strided_slice %4 {offsets = [3, 0], sizes = [1, 128], strides = [1, 1]} : vector<4x256xf32> to vector<1x128xf32>
    %27 = vector.broadcast %25 : vector<8x1xf32> to vector<8x128xf32>
    %28 = vector.broadcast %26 : vector<1x128xf32> to vector<8x128xf32>
    %29 = arith.mulf %27, %28 : vector<8x128xf32>
    %30 = arith.addf %24, %29 : vector<8x128xf32>
    %31 = vector.extract_strided_slice %5 {offsets = [0, 4], sizes = [8, 1], strides = [1, 1]} : vector<8x12xf32> to vector<8x1xf32>
    %32 = vector.extract_strided_slice %4 {offsets = [0, 1], sizes = [1, 128], strides = [1, 1]} : vector<4x256xf32> to vector<1x128xf32>
    %33 = vector.broadcast %31 : vector<8x1xf32> to vector<8x128xf32>
    %34 = vector.broadcast %32 : vector<1x128xf32> to vector<8x128xf32>
    %35 = arith.mulf %33, %34 : vector<8x128xf32>
    %36 = arith.addf %30, %35 : vector<8x128xf32>
    %37 = vector.extract_strided_slice %5 {offsets = [0, 5], sizes = [8, 1], strides = [1, 1]} : vector<8x12xf32> to vector<8x1xf32>
    %38 = vector.extract_strided_slice %4 {offsets = [1, 1], sizes = [1, 128], strides = [1, 1]} : vector<4x256xf32> to vector<1x128xf32>
    %39 = vector.broadcast %37 : vector<8x1xf32> to vector<8x128xf32>
    %40 = vector.broadcast %38 : vector<1x128xf32> to vector<8x128xf32>
    %41 = arith.mulf %39, %40 : vector<8x128xf32>
    %42 = arith.addf %36, %41 : vector<8x128xf32>
    %43 = vector.extract_strided_slice %5 {offsets = [0, 6], sizes = [8, 1], strides = [1, 1]} : vector<8x12xf32> to vector<8x1xf32>
    %44 = vector.extract_strided_slice %4 {offsets = [2, 1], sizes = [1, 128], strides = [1, 1]} : vector<4x256xf32> to vector<1x128xf32>
    %45 = vector.broadcast %43 : vector<8x1xf32> to vector<8x128xf32>
    %46 = vector.broadcast %44 : vector<1x128xf32> to vector<8x128xf32>
    %47 = arith.mulf %45, %46 : vector<8x128xf32>
    %48 = arith.addf %42, %47 : vector<8x128xf32>
    %49 = vector.extract_strided_slice %5 {offsets = [0, 7], sizes = [8, 1], strides = [1, 1]} : vector<8x12xf32> to vector<8x1xf32>
    %50 = vector.extract_strided_slice %4 {offsets = [3, 1], sizes = [1, 128], strides = [1, 1]} : vector<4x256xf32> to vector<1x128xf32>
    %51 = vector.broadcast %49 : vector<8x1xf32> to vector<8x128xf32>
    %52 = vector.broadcast %50 : vector<1x128xf32> to vector<8x128xf32>
    %53 = arith.mulf %51, %52 : vector<8x128xf32>
    %54 = arith.addf %48, %53 : vector<8x128xf32>
    %55 = vector.extract_strided_slice %5 {offsets = [0, 8], sizes = [8, 1], strides = [1, 1]} : vector<8x12xf32> to vector<8x1xf32>
    %56 = vector.extract_strided_slice %4 {offsets = [0, 2], sizes = [1, 128], strides = [1, 1]} : vector<4x256xf32> to vector<1x128xf32>
    %57 = vector.broadcast %55 : vector<8x1xf32> to vector<8x128xf32>
    %58 = vector.broadcast %56 : vector<1x128xf32> to vector<8x128xf32>
    %59 = arith.mulf %57, %58 : vector<8x128xf32>
    %60 = arith.addf %54, %59 : vector<8x128xf32>
    %61 = vector.extract_strided_slice %5 {offsets = [0, 9], sizes = [8, 1], strides = [1, 1]} : vector<8x12xf32> to vector<8x1xf32>
    %62 = vector.extract_strided_slice %4 {offsets = [1, 2], sizes = [1, 128], strides = [1, 1]} : vector<4x256xf32> to vector<1x128xf32>
    %63 = vector.broadcast %61 : vector<8x1xf32> to vector<8x128xf32>
    %64 = vector.broadcast %62 : vector<1x128xf32> to vector<8x128xf32>
    %65 = arith.mulf %63, %64 : vector<8x128xf32>
    %66 = arith.addf %60, %65 : vector<8x128xf32>
    %67 = vector.extract_strided_slice %5 {offsets = [0, 10], sizes = [8, 1], strides = [1, 1]} : vector<8x12xf32> to vector<8x1xf32>
    %68 = vector.extract_strided_slice %4 {offsets = [2, 2], sizes = [1, 128], strides = [1, 1]} : vector<4x256xf32> to vector<1x128xf32>
    %69 = vector.broadcast %67 : vector<8x1xf32> to vector<8x128xf32>
    %70 = vector.broadcast %68 : vector<1x128xf32> to vector<8x128xf32>
    %71 = arith.mulf %69, %70 : vector<8x128xf32>
    %72 = arith.addf %66, %71 : vector<8x128xf32>
    %73 = vector.extract_strided_slice %5 {offsets = [0, 11], sizes = [8, 1], strides = [1, 1]} : vector<8x12xf32> to vector<8x1xf32>
    %74 = vector.extract_strided_slice %4 {offsets = [3, 2], sizes = [1, 128], strides = [1, 1]} : vector<4x256xf32> to vector<1x128xf32>
    %75 = vector.broadcast %73 : vector<8x1xf32> to vector<8x128xf32>
    %76 = vector.broadcast %74 : vector<1x128xf32> to vector<8x128xf32>
    %77 = arith.mulf %75, %76 : vector<8x128xf32>
    %78 = arith.addf %72, %77 : vector<8x128xf32>
    %c0_7 = arith.constant 0 : index
    %c0_8 = arith.constant 0 : index
    %79 = vector.load %arg5[%c0_7, %c0_8] : memref<8x1xf32, #tpu.memory_space<vmem>>, vector<8x1xf32>
    %80 = vector.broadcast %79 : vector<8x1xf32> to vector<8x128xf32>
    %81 = arith.addf %78, %80 : vector<8x128xf32>
    %c0_9 = arith.constant 0 : index
    %c0_10 = arith.constant 0 : index
    %c0_11 = arith.constant 0 : index
    %82 = vector.load %arg6[%c0_9, %c0_10, %c0_11] : memref<1x8x128xf32, #tpu.memory_space<vmem>>, vector<1x8x128xf32>
    %83 = vector.shape_cast %82 : vector<1x8x128xf32> to vector<8x128xf32>
    %84 = vector.shape_cast %81 : vector<8x128xf32> to vector<1x8x128xf32>
    tpu.vector_store %arg6[%c0_9, %c0_10, %c0_11], %84 {strides = array<i32>} : memref<1x8x128xf32, #tpu.memory_space<vmem>>, vector<1x8x128xf32>,
    return
  }
  func.func @transform_0(%arg0: i32, %arg1: i32) -> (i32, i32, i32) {
    %c0_i32 = arith.constant 0 : i32
    %c0_i32_0 = arith.constant 0 : i32
    return %arg0, %c0_i32, %arg1 : i32, i32, i32
  }
  func.func @transform_1(%arg0: i32, %arg1: i32) -> (i32, i32, i32) {
    %c1_i32 = arith.constant 1 : i32
    %0 = arith.addi %arg1, %c1_i32 : i32
    %c1_i32_0 = arith.constant 1 : i32
    %1 = arith.muli %0, %c1_i32_0 : i32
    %c0_i32 = arith.constant 0 : i32
    %c0_i32_1 = arith.constant 0 : i32
    return %arg0, %c0_i32, %1 : i32, i32, i32
  }
  func.func @transform_2(%arg0: i32, %arg1: i32) -> (i32, i32) {
    %c0_i32 = arith.constant 0 : i32
    %c0_i32_0 = arith.constant 0 : i32
    %c0_i32_1 = arith.constant 0 : i32
    return %c0_i32, %c0_i32_0 : i32, i32
  }
  func.func @transform_3(%arg0: i32, %arg1: i32) -> (i32, i32) {
    %c0_i32 = arith.constant 0 : i32
    %c0_i32_0 = arith.constant 0 : i32
    %c0_i32_1 = arith.constant 0 : i32
    return %c0_i32, %c0_i32_0 : i32, i32
  }
  func.func @transform_4(%arg0: i32, %arg1: i32) -> (i32, i32, i32) {
    %c0_i32 = arith.constant 0 : i32
    %c0_i32_0 = arith.constant 0 : i32
    return %arg0, %c0_i32, %arg1 : i32, i32, i32
  }
}

</mosaic_0001>

<llo_original>
// kernel: tpu_custom_call.1
$region0: #{tpu_custom_call.1}
  #allocation0 [shape = 'u32[]', space=smem, size = 0x4, offset = 0x4, fixed_abs, tag = 'smem constant byte address 0x4 - core index']
  #allocation1 [shape = 'u32[144,128]{1,0:T(1,128)}', space=vmem, size = 0x12000, scoped, tag = 'internal scratch']
  %s0 = inlined_call_operand.hbm [shape: f32[2,4,256], index: 0, kind: input, shape index: {}]
  %s1 = inlined_call_operand.hbm [shape: f32[2,4,256], index: 1, kind: input, shape index: {}]
  %s2 = inlined_call_operand.vmem [shape: f32[8,12], index: 2, kind: input, shape index: {}]
  %s3 = inlined_call_operand.vmem [shape: f32[8,1], index: 3, kind: input, shape index: {}]
  %s4 = inlined_call_operand.hbm [shape: f32[2,8,128], index: 4, kind: output, shape index: {}]
  %s5 = sld [smem:[#allocation0]]
  $region57: #{tpu_custom_call.1} parent=0
    _
  %s7 = ssub.s32 1, %s5
  %s8 = scalar_select 0, %s7, %s5
  $region1: #{tpu_custom_call.1} parent=0
    #allocation2 [shape = 'u8[4096]{0}', space=vmem, size = 0x1000, scoped, tag = 'input window, operand 0']
    #allocation3 [shape = 's32[2]{0}', space=sflag, size = 0x8, scoped, tag = 'scoped memory for tpu_custom_call.1']
    #allocation4 [shape = 's32[2]{0}', space=sflag, size = 0x8, scoped, tag = 'scoped memory for tpu_custom_call.1']
    #allocation5 [shape = 'u8[4096]{0}', space=vmem, size = 0x1000, scoped, tag = 'input window, operand 1']
    #allocation6 [shape = 's32[2]{0}', space=sflag, size = 0x8, scoped, tag = 'scoped memory for tpu_custom_call.1']
    #allocation7 [shape = 'u8[8192]{0}', space=vmem, size = 0x2000, scoped, tag = 'output window, operand 0']
    %9 = vsyncpa [#allocation3], 0
    %s10 = scalar_lea.sflag [#allocation3], 1
    %11 = vsyncpa %s10, 0
    %12 = vsyncpa [#allocation6], 0
    %s13 = scalar_lea.sflag [#allocation6], 1
    %14 = vsyncpa %s13, 0
    %15 = vsyncpa [#allocation4], 0
    %s16 = scalar_lea.sflag [#allocation4], 1
    %17 = vsyncpa %s16, 0
    loop: start=0, step=1, limit=4
    $region2: #{tpu_custom_call.1} parent=1 // loop_pre_header
      _
    $region3: #{tpu_custom_call.1} parent=1 // loop_header
      %s19 = sphi 0, %s23
      %p20 = scmp.ge.s32.totalorder %s19, 4
      %s26 = sphi 0, %s38
      %s27 = sphi 0, %s34
      %s28 = sphi 0, %s26
      %s29 = sphi 0, %s27
      %s30 = sphi 0, %s28
      %s31 = sphi 0, %s29
      %s43 = sphi 0, %s45
      %s46 = sphi 0, %s43
      %s47 = sphi 0, %s46
      %s63 = sphi 0, %s47
      %s73 = sphi 0, %s75
      %s76 = sphi 0, %s73
      %s77 = sphi 0, %s76
      %s93 = sphi 0, %s77
      %s97 = sphi 0, %s97
      %s99 = sphi 0, %s97
      %s100 = sphi 0, %s99
      %s114 = sphi 0, %s100
      %s118 = sphi 0, %s118
      %s120 = sphi 0, %s118
      %s121 = sphi 0, %s120
      %s135 = sphi 0, %s121
      %s143 = sphi 0, %s145
      %s146 = sphi 0, %s143
      %s147 = sphi 0, %s146
      %s163 = sphi 0, %s147
    $region4: #{tpu_custom_call.1} parent=1 // loop_header_branch
      %22 = sbr.rel (%p20) target = $region8
    $region5: #{tpu_custom_call.1} parent=1 // loop_body
      %s24 = ssub.s32 %s19, 1
      %s25 = ssub.s32 %s19, 2
      %s32 = sadd.s32 1, %s27
      %p33 = scmp.ge.s32.totalorder %s32, 1
      %s34 = scalar_select %p33, 0, %s32
      %s35 = sadd.s32 1, %s26
      %s36 = scalar_select %p33, %s35, %s26
      %p37 = scmp.ge.s32.totalorder %s36, 2
      %s38 = scalar_select %p37, 0, %s36
      %s39 = ssub.s32 %s26, %s38
      %s40 = ssub.s32 %s27, %s34
      %s41 = sor.u32 %s39, %s40
      %p42 = scmp.eq.s32.totalorder %s41, 0
      %s44 = sadd.s32 %s43, 1
      %s45 = scalar_select %p42, %s43, %s44
      %p48 = pneg %p42
      %p49 = scmp.eq.s32.totalorder %s19, 1
      %p50 = por %p48, %p49
      %p51 = scmp.ne.s32.totalorder %s43, %s46
      %p52 = scmp.eq.s32.totalorder %s19, 0
      %p53 = por %p51, %p52
      %p54 = scmp.ne.s32.totalorder %s43, %s46
      %p55 = scmp.eq.s32.totalorder %s24, 1
      %p56 = por %p54, %p55
      %p57 = scmp.ne.s32.totalorder %s46, %s47
      %p58 = scmp.eq.s32.totalorder %s24, 0
      %p59 = por %p57, %p58
      %p60 = scmp.ne.s32.totalorder %s46, %s47
      %p61 = scmp.eq.s32.totalorder %s25, 1
      %p62 = por %p60, %p61
      %p64 = scmp.ne.s32.totalorder %s47, %s63
      %p65 = scmp.eq.s32.totalorder %s25, 0
      %p66 = por %p64, %p65
      %s67 = sadd.s32 %s27, 1
      %s68 = sadd.s32 %s34, 1
      %s69 = ssub.s32 %s26, %s38
      %s70 = ssub.s32 %s67, %s68
      %s71 = sor.u32 %s69, %s70
      %p72 = scmp.eq.s32.totalorder %s71, 0
      %s74 = sadd.s32 %s73, 1
      %s75 = scalar_select %p72, %s73, %s74
      %p78 = pneg %p72
      %p79 = scmp.eq.s32.totalorder %s19, 1
      %p80 = por %p78, %p79
      %p81 = scmp.ne.s32.totalorder %s73, %s76
      %p82 = scmp.eq.s32.totalorder %s19, 0
      %p83 = por %p81, %p82
      %p84 = scmp.ne.s32.totalorder %s73, %s76
      %p85 = scmp.eq.s32.totalorder %s24, 1
      %p86 = por %p84, %p85
      %p87 = scmp.ne.s32.totalorder %s76, %s77
      %p88 = scmp.eq.s32.totalorder %s24, 0
      %p89 = por %p87, %p88
      %p90 = scmp.ne.s32.totalorder %s76, %s77
      %p91 = scmp.eq.s32.totalorder %s25, 1
      %p92 = por %p90, %p91
      %p94 = scmp.ne.s32.totalorder %s77, %s93
      %p95 = scmp.eq.s32.totalorder %s25, 0
      %p96 = por %p94, %p95
      %s98 = sadd.s32 %s97, 1
      %p101 = scmp.eq.s32.totalorder %s19, 1
      %p102 = scmp.ne.s32.totalorder %s97, %s99
      %p103 = scmp.eq.s32.totalorder %s19, 0
      %p104 = por %p102, %p103
      %p105 = scmp.ne.s32.totalorder %s97, %s99
      %p106 = scmp.eq.s32.totalorder %s24, 1
      %p107 = por %p105, %p106
      %p108 = scmp.ne.s32.totalorder %s99, %s100
      %p109 = scmp.eq.s32.totalorder %s24, 0
      %p110 = por %p108, %p109
      %p111 = scmp.ne.s32.totalorder %s99, %s100
      %p112 = scmp.eq.s32.totalorder %s25, 1
      %p113 = por %p111, %p112
      %p115 = scmp.ne.s32.totalorder %s100, %s114
      %p116 = scmp.eq.s32.totalorder %s25, 0
      %p117 = por %p115, %p116
      %s119 = sadd.s32 %s118, 1
      %p122 = scmp.eq.s32.totalorder %s19, 1
      %p123 = scmp.ne.s32.totalorder %s118, %s120
      %p124 = scmp.eq.s32.totalorder %s19, 0
      %p125 = por %p123, %p124
      %p126 = scmp.ne.s32.totalorder %s118, %s120
      %p127 = scmp.eq.s32.totalorder %s24, 1
      %p128 = por %p126, %p127
      %p129 = scmp.ne.s32.totalorder %s120, %s121
      %p130 = scmp.eq.s32.totalorder %s24, 0
      %p131 = por %p129, %p130
      %p132 = scmp.ne.s32.totalorder %s120, %s121
      %p133 = scmp.eq.s32.totalorder %s25, 1
      %p134 = por %p132, %p133
      %p136 = scmp.ne.s32.totalorder %s121, %s135
      %p137 = scmp.eq.s32.totalorder %s25, 0
      %p138 = por %p136, %p137
      %s139 = ssub.s32 %s26, %s38
      %s140 = ssub.s32 %s27, %s34
      %s141 = sor.u32 %s139, %s140
      %p142 = scmp.eq.s32.totalorder %s141, 0
      %s144 = sadd.s32 %s143, 1
      %s145 = scalar_select %p142, %s143, %s144
      %p148 = pneg %p142
      %p149 = scmp.eq.s32.totalorder %s19, 1
      %p150 = por %p148, %p149
      %p151 = scmp.ne.s32.totalorder %s143, %s146
      %p152 = scmp.eq.s32.totalorder %s19, 0
      %p153 = por %p151, %p152
      %p154 = scmp.ne.s32.totalorder %s143, %s146
      %p155 = scmp.eq.s32.totalorder %s24, 1
      %p156 = por %p154, %p155
      %p157 = scmp.ne.s32.totalorder %s146, %s147
      %p158 = scmp.eq.s32.totalorder %s24, 0
      %p159 = por %p157, %p158
      %p160 = scmp.ne.s32.totalorder %s146, %s147
      %p161 = scmp.eq.s32.totalorder %s25, 1
      %p162 = por %p160, %p161
      %p164 = scmp.ne.s32.totalorder %s147, %s163
      %p165 = scmp.eq.s32.totalorder %s25, 0
      %p166 = por %p164, %p165
      %p167 = scmp.le.s32.totalorder 1, %s19
      %p168 = scmp.lt.s32.totalorder %s19, 3
      %p169 = pnand %p167, %p168
      %p170 = pneg %p169
      // Predicated region
      $region9: #{tpu_custom_call.1} parent=5 // pred_check
        _
      $region10: #{tpu_custom_call.1} parent=5 // pred_check_branch
        %172 = sbr.rel (%p169) target = $region12
      $region11: #{tpu_custom_call.1} parent=5 // pred_region
        %s173 = ssub.s32 %s19, 1
        // Predicated region
        $region13: #{tpu_custom_call.1} parent=11 // pred_check
          %p174 = pneg %p110
        $region14: #{tpu_custom_call.1} parent=11 // pred_check_branch
          %176 = sbr.rel (%p174) target = $region16
        $region15: #{tpu_custom_call.1} parent=11 // pred_region
          _
        $region16: #{tpu_custom_call.1} parent=11 // pred_fallthru
          _
        // Predicated region
        $region17: #{tpu_custom_call.1} parent=11 // pred_check
          %p177 = pneg %p131
        $region18: #{tpu_custom_call.1} parent=11 // pred_check_branch
          %179 = sbr.rel (%p177) target = $region20
        $region19: #{tpu_custom_call.1} parent=11 // pred_region
          _
        $region20: #{tpu_custom_call.1} parent=11 // pred_fallthru
          _
      $region12: #{tpu_custom_call.1} parent=5 // pred_fallthru
        _
      %p180 = scmp.lt.s32.totalorder %s19, 2
      // Predicated region
      $region21: #{tpu_custom_call.1} parent=5 // pred_check
        %p181 = pneg %p180
      $region22: #{tpu_custom_call.1} parent=5 // pred_check_branch
        %183 = sbr.rel (%p181) target = $region24
      $region23: #{tpu_custom_call.1} parent=5 // pred_region
        // Predicated region
        $region25: #{tpu_custom_call.1} parent=23 // pred_check
          %p184 = pneg %p53
        $region26: #{tpu_custom_call.1} parent=23 // pred_check_branch
          %186 = sbr.rel (%p184) target = $region28
        $region27: #{tpu_custom_call.1} parent=23 // pred_region
          %s187 = sand.u32 %s43, 1
          %s188 = scalar_lea.sflag [#allocation3], %s187
          %s189 = sand.u32 %s43, 1
          %s190 = smul.addr %s189, 4
          %s191 = scalar_lea.vmem [#allocation2], %s190
          %s193 = ssub.s32 64, 64
          %194 = vsyncadd %s188, %s193
          %s195 = smul.addr %s26, 2
          %s196 = sadd.s32 %s27, %s195
          %s197 = smul.addr %s196, 64
          %s198 = scalar_lea.hbm %s0, %s197
          %s200 = sshll.u32 %s191, 4
          %s201 = int_to_ptr.vmem [resolvable:$true] %s200
          %203 = dma.hbm_to_vmem [thread:$0]  %s198, 64, %s201, %s188
        $region28: #{tpu_custom_call.1} parent=23 // pred_fallthru
          _
        // Predicated region
        $region29: #{tpu_custom_call.1} parent=23 // pred_check
          %p204 = pneg %p83
        $region30: #{tpu_custom_call.1} parent=23 // pred_check_branch
          %206 = sbr.rel (%p204) target = $region32
        $region31: #{tpu_custom_call.1} parent=23 // pred_region
          %s207 = sand.u32 %s73, 1
          %s208 = scalar_lea.sflag [#allocation6], %s207
          %s209 = sand.u32 %s73, 1
          %s210 = smul.addr %s209, 4
          %s211 = scalar_lea.vmem [#allocation5], %s210
          %s212 = sadd.s32 %s27, 1
          %s214 = ssub.s32 64, 64
          %215 = vsyncadd %s208, %s214
          %s216 = smul.addr %s26, 2
          %s217 = sadd.s32 %s212, %s216
          %s218 = smul.addr %s217, 64
          %s219 = scalar_lea.hbm %s1, %s218
          %s221 = sshll.u32 %s211, 4
          %s222 = int_to_ptr.vmem [resolvable:$true] %s221
          %224 = dma.hbm_to_vmem [thread:$0]  %s219, 64, %s222, %s208
        $region32: #{tpu_custom_call.1} parent=23 // pred_fallthru
          _
      $region24: #{tpu_custom_call.1} parent=5 // pred_fallthru
        _
      %p225 = scmp.le.s32.totalorder 1, %s19
      %p226 = scmp.lt.s32.totalorder %s19, 3
      %p227 = pnand %p225, %p226
      %p228 = pneg %p227
      // Predicated region
      $region33: #{tpu_custom_call.1} parent=5 // pred_check
        _
      $region34: #{tpu_custom_call.1} parent=5 // pred_check_branch
        %230 = sbr.rel (%p227) target = $region36
      $region35: #{tpu_custom_call.1} parent=5 // pred_region
        %s231 = ssub.s32 %s19, 1
        %s232 = sand.u32 %s46, 1
        %s233 = scalar_lea.sflag [#allocation3], %s232
        %s234 = sand.u32 %s46, 1
        %s235 = smul.addr %s234, 4
        %s236 = scalar_lea.vmem [#allocation2], %s235
        // Predicated region
        $region37: #{tpu_custom_call.1} parent=35 // pred_check
          %p237 = pneg %p59
        $region38: #{tpu_custom_call.1} parent=35 // pred_check_branch
          %239 = sbr.rel (%p237) target = $region40
        $region39: #{tpu_custom_call.1} parent=35 // pred_region
          %240 = dma.done %s233, 64
        $region40: #{tpu_custom_call.1} parent=35 // pred_fallthru
          _
        %s241 = sand.u32 %s76, 1
        %s242 = scalar_lea.sflag [#allocation6], %s241
        %s243 = sand.u32 %s76, 1
        %s244 = smul.addr %s243, 4
        %s245 = scalar_lea.vmem [#allocation5], %s244
        // Predicated region
        $region41: #{tpu_custom_call.1} parent=35 // pred_check
          %p246 = pneg %p89
        $region42: #{tpu_custom_call.1} parent=35 // pred_check_branch
          %248 = sbr.rel (%p246) target = $region44
        $region43: #{tpu_custom_call.1} parent=35 // pred_region
          %249 = dma.done %s242, 64
        $region44: #{tpu_custom_call.1} parent=35 // pred_fallthru
          _
        %s250 = sand.u32 %s46, 1
        %s251 = scalar_lea.sflag [#allocation3], %s250
        %s252 = sand.u32 %s46, 1
        %s253 = smul.addr %s252, 4
        %s254 = scalar_lea.vmem [#allocation2], %s253
        %p255 = pneg %p59
        %p256 = pneg %p56
        %s257 = sand.u32 %s76, 1
        %s258 = scalar_lea.sflag [#allocation6], %s257
        %s259 = sand.u32 %s76, 1
        %s260 = smul.addr %s259, 4
        %s261 = scalar_lea.vmem [#allocation5], %s260
        %p262 = pneg %p89
        %p263 = pneg %p86
        %p264 = pneg %p110
        %p265 = pneg %p107
        %p266 = pneg %p131
        %p267 = pneg %p128
        %p268 = pneg %p159
        %p269 = pneg %p156
        %s270 = sand.u32 %s146, 1
        %s271 = scalar_lea.sflag [#allocation4], %s270
        %s272 = sand.u32 %s146, 1
        %s273 = smul.addr %s272, 8
        %s274 = scalar_lea.vmem [#allocation7], %s273
        %s275 = sadd.s32 %s29, 1
        %v276 = vld [vmem:[%s236] sm:$0xf]
        %v277 = vld [vmem:[%s245] sm:$0xf]
        %v278 = vld [vmem:[%s2] sm:$0xff]
        %280 = vset.pattern.permute.xlu0 0
        %281 = vperm.xlu0 %280, %v278
        %v282 = vpop.permute.xlu0 %281
        %v284 = vlaneseq
        %v285 = vshrl.u32 %v284, 7
        %v286 = vsub.s32 0, %v285
        %v287 = vrot.slane %v276, %v286
        %v288 = vmul.f32 %v282, %v287
        %v289 = vadd.f32 %v288, 0.0
        %290 = vset.pattern.permute.xlu0 1
        %291 = vperm.xlu0 %290, %v278
        %v292 = vpop.permute.xlu0 %291
        %v294 = vlaneseq
        %v295 = vshrl.u32 %v294, 7
        %v296 = vsub.s32 1, %v295
        %v297 = vrot.slane %v276, %v296
        %v298 = vmul.f32 %v292, %v297
        %v299 = vadd.f32 %v289, %v298
        %300 = vset.pattern.permute.xlu0 2
        %301 = vperm.xlu0 %300, %v278
        %v302 = vpop.permute.xlu0 %301
        %v304 = vlaneseq
        %v305 = vshrl.u32 %v304, 7
        %v306 = vsub.s32 2, %v305
        %v307 = vrot.slane %v276, %v306
        %v308 = vmul.f32 %v302, %v307
        %v309 = vadd.f32 %v299, %v308
        %310 = vset.pattern.permute.xlu0 3
        %311 = vperm.xlu0 %310, %v278
        %v312 = vpop.permute.xlu0 %311
        %v314 = vlaneseq
        %v315 = vshrl.u32 %v314, 7
        %v316 = vsub.s32 3, %v315
        %v317 = vrot.slane %v276, %v316
        %v318 = vmul.f32 %v312, %v317
        %v319 = vadd.f32 %v309, %v318
        %320 = vset.pattern.permute.xlu0 4
        %321 = vperm.xlu0 %320, %v278
        %v322 = vpop.permute.xlu0 %321
        %v324 = vlaneseq
        %v325 = vshrl.u32 %v324, 7
        %v326 = vsub.s32 0, %v325
        %v327 = vrot.slane %v277, %v326
        %v328 = vmul.f32 %v322, %v287
        %v329 = vmul.f32 %v322, %v327
        %332 = vrot.lane.b32.xlu0 %v328, 127
        %v333 = vpop.permute.xlu0 %332
        %334 = vrot.lane.b32.xlu0 %v329, 127
        %v335 = vpop.permute.xlu0 %334
        %vm336 = vcmask 1039360
        %v337 = vsel %vm336, %v333, %v335
        %v339 = vadd.f32 %v319, %v337
        %340 = vset.pattern.permute.xlu0 5
        %341 = vperm.xlu0 %340, %v278
        %v342 = vpop.permute.xlu0 %341
        %v344 = vlaneseq
        %v345 = vshrl.u32 %v344, 7
        %v346 = vsub.s32 1, %v345
        %v347 = vrot.slane %v277, %v346
        %v348 = vmul.f32 %v342, %v297
        %v349 = vmul.f32 %v342, %v347
        %352 = vrot.lane.b32.xlu0 %v348, 127
        %v353 = vpop.permute.xlu0 %352
        %354 = vrot.lane.b32.xlu0 %v349, 127
        %v355 = vpop.permute.xlu0 %354
        %v356 = vsel %vm336, %v353, %v355
        %v358 = vadd.f32 %v339, %v356
        %359 = vset.pattern.permute.xlu0 6
        %360 = vperm.xlu0 %359, %v278
        %v361 = vpop.permute.xlu0 %360
        %v363 = vlaneseq
        %v364 = vshrl.u32 %v363, 7
        %v365 = vsub.s32 2, %v364
        %v366 = vrot.slane %v277, %v365
        %v367 = vmul.f32 %v361, %v307
        %v368 = vmul.f32 %v361, %v366
        %371 = vrot.lane.b32.xlu0 %v367, 127
        %v372 = vpop.permute.xlu0 %371
        %373 = vrot.lane.b32.xlu0 %v368, 127
        %v374 = vpop.permute.xlu0 %373
        %v375 = vsel %vm336, %v372, %v374
        %v377 = vadd.f32 %v358, %v375
        %378 = vset.pattern.permute.xlu0 7
        %379 = vperm.xlu0 %378, %v278
        %v380 = vpop.permute.xlu0 %379
        %v382 = vlaneseq
        %v383 = vshrl.u32 %v382, 7
        %v384 = vsub.s32 3, %v383
        %v385 = vrot.slane %v277, %v384
        %v386 = vmul.f32 %v380, %v317
        %v387 = vmul.f32 %v380, %v385
        %390 = vrot.lane.b32.xlu0 %v386, 127
        %v391 = vpop.permute.xlu0 %390
        %392 = vrot.lane.b32.xlu0 %v387, 127
        %v393 = vpop.permute.xlu0 %392
        %v394 = vsel %vm336, %v391, %v393
        %v396 = vadd.f32 %v377, %v394
        %397 = vset.pattern.permute.xlu0 8
        %398 = vperm.xlu0 %397, %v278
        %v399 = vpop.permute.xlu0 %398
        %v401 = vmul.f32 %v399, %v287
        %v402 = vmul.f32 %v399, %v327
        %405 = vrot.lane.b32.xlu0 %v401, 126
        %v406 = vpop.permute.xlu0 %405
        %407 = vrot.lane.b32.xlu0 %v402, 126
        %v408 = vpop.permute.xlu0 %407
        %vm409 = vcmask 1031168
        %v410 = vsel %vm409, %v406, %v408
        %v412 = vadd.f32 %v396, %v410
        %413 = vset.pattern.permute.xlu0 9
        %414 = vperm.xlu0 %413, %v278
        %v415 = vpop.permute.xlu0 %414
        %v417 = vmul.f32 %v415, %v297
        %v418 = vmul.f32 %v415, %v347
        %421 = vrot.lane.b32.xlu0 %v417, 126
        %v422 = vpop.permute.xlu0 %421
        %423 = vrot.lane.b32.xlu0 %v418, 126
        %v424 = vpop.permute.xlu0 %423
        %v425 = vsel %vm409, %v422, %v424
        %v427 = vadd.f32 %v412, %v425
        %428 = vset.pattern.permute.xlu0 10
        %429 = vperm.xlu0 %428, %v278
        %v430 = vpop.permute.xlu0 %429
        %v432 = vmul.f32 %v430, %v307
        %v433 = vmul.f32 %v430, %v366
        %436 = vrot.lane.b32.xlu0 %v432, 126
        %v437 = vpop.permute.xlu0 %436
        %438 = vrot.lane.b32.xlu0 %v433, 126
        %v439 = vpop.permute.xlu0 %438
        %v440 = vsel %vm409, %v437, %v439
        %v442 = vadd.f32 %v427, %v440
        %443 = vset.pattern.permute.xlu0 11
        %444 = vperm.xlu0 %443, %v278
        %v445 = vpop.permute.xlu0 %444
        %v447 = vmul.f32 %v445, %v317
        %v448 = vmul.f32 %v445, %v385
        %451 = vrot.lane.b32.xlu0 %v447, 126
        %v452 = vpop.permute.xlu0 %451
        %453 = vrot.lane.b32.xlu0 %v448, 126
        %v454 = vpop.permute.xlu0 %453
        %v455 = vsel %vm409, %v452, %v454
        %v457 = vadd.f32 %v442, %v455
        %v458 = vld [vmem:[%s3] sm:$0xff]
        %460 = vset.pattern.permute.xlu0 0
        %461 = vperm.xlu0 %460, %v458
        %v462 = vpop.permute.xlu0 %461
        %v464 = vadd.f32 %v457, %v462
        %465 = vst [vmem:[%s274] sm:$0xff] %v464
        %s466 = sand.u32 %s146, 1
        %s467 = scalar_lea.sflag [#allocation4], %s466
        %s468 = sand.u32 %s146, 1
        %s469 = smul.addr %s468, 8
        %s470 = scalar_lea.vmem [#allocation7], %s469
        // Predicated region
        $region45: #{tpu_custom_call.1} parent=35 // pred_check
          %p471 = pneg %p156
        $region46: #{tpu_custom_call.1} parent=35 // pred_check_branch
          %473 = sbr.rel (%p471) target = $region48
        $region47: #{tpu_custom_call.1} parent=35 // pred_region
          %s475 = ssub.s32 128, 128
          %476 = vsyncadd %s467, %s475
          %s477 = sadd.s32 %s29, %s28
          %s478 = smul.addr %s477, 128
          %s479 = scalar_lea.hbm %s4, %s478
          %s481 = sshll.u32 %s470, 4
          %s482 = int_to_ptr.vmem [resolvable:$true] %s481
          %484 = dma.vmem_to_hbm [thread:$0]  %s482, 128, %s479, %s467
        $region48: #{tpu_custom_call.1} parent=35 // pred_fallthru
          _
      $region36: #{tpu_custom_call.1} parent=5 // pred_fallthru
        _
      %p485 = scmp.le.s32.totalorder 2, %s19
      // Predicated region
      $region49: #{tpu_custom_call.1} parent=5 // pred_check
        %p486 = pneg %p485
      $region50: #{tpu_custom_call.1} parent=5 // pred_check_branch
        %488 = sbr.rel (%p486) target = $region52
      $region51: #{tpu_custom_call.1} parent=5 // pred_region
        %s489 = ssub.s32 %s19, 2
        // Predicated region
        $region53: #{tpu_custom_call.1} parent=51 // pred_check
          %p490 = pneg %p162
        $region54: #{tpu_custom_call.1} parent=51 // pred_check_branch
          %492 = sbr.rel (%p490) target = $region56
        $region55: #{tpu_custom_call.1} parent=51 // pred_region
          %s493 = sand.u32 %s147, 1
          %s494 = scalar_lea.sflag [#allocation4], %s493
          %s495 = sand.u32 %s147, 1
          %s496 = smul.addr %s495, 8
          %s497 = scalar_lea.vmem [#allocation7], %s496
          %498 = dma.done %s494, 128
        $region56: #{tpu_custom_call.1} parent=51 // pred_fallthru
          _
      $region52: #{tpu_custom_call.1} parent=5 // pred_fallthru
        _
    $region6: #{tpu_custom_call.1} parent=1 // loop_footer
      %s23 = sadd.s32 1, %s19
    $region7: #{tpu_custom_call.1} parent=1 // loop_footer_branch
      %18 = sbr.rel target = $region3
    $region8: #{tpu_custom_call.1} parent=1 // loop_exit
      _
    %499 = vsyncpa [#allocation3], 1
    %s500 = scalar_lea.sflag [#allocation3], 1
    %501 = vsyncpa %s500, 1
    %502 = vsyncpa [#allocation6], 1
    %s503 = scalar_lea.sflag [#allocation6], 1
    %504 = vsyncpa %s503, 1
    %505 = vsyncpa [#allocation4], 1
    %s506 = scalar_lea.sflag [#allocation4], 1
    %507 = vsyncpa %s506, 1

</llo_original>
